<compile_context>
chip_gen: v7x
topology: tpu7x:2x2x1
jax: 0.10.0
libtpu: 0.0.40
codegen_flags: <defaults>
</compile_context>

<pallas_src>
import functools

import jax
import jax.numpy as jnp
from jax.experimental import pallas as pl
from jax.experimental.pallas import tpu as pltpu

EPS = 1e-5
VMEM_LIMIT = 32 * 1024 * 1024  # conservative for v7x's 64 MiB VMEM / v5e defaults


def _round_up(x, m):
    return ((x + m - 1) // m) * m


def _conv_stats_kernel(w_ref, p_ref, y_ref, sum_ref, ssq_ref):
    # w_ref:   [C_out, CK]  reshaped conv weight (resident across grid)
    # p_ref:   [CK, TM]     transposed im2col patch tile (zero-padded columns)
    # y_ref:   [C_out, TM]  pre-BN conv output tile (lane-dense store)
    # sum_ref: [C_out, 1]   running per-channel sum      (resident accumulator)
    # ssq_ref: [C_out, 1]   running per-channel sum(y^2) (resident accumulator)
    i = pl.program_id(0)

    @pl.when(i == 0)
    def _():
        sum_ref[...] = jnp.zeros_like(sum_ref)
        ssq_ref[...] = jnp.zeros_like(ssq_ref)

    # Conv bias intentionally omitted: a per-channel constant cancels exactly
    # in training-mode BatchNorm (y - mean(y)).
    y = jnp.dot(w_ref[...], p_ref[...], preferred_element_type=jnp.float32)
    y_ref[...] = y
    # Padded columns are exactly zero (zero patches, no bias) -> no masking
    # needed for the statistics; we divide by the true M in phase 2.
    sum_ref[...] += jnp.sum(y, axis=1, keepdims=True)
    ssq_ref[...] += jnp.sum(y * y, axis=1, keepdims=True)


def _bn_sigmoid_kernel(sum_ref, ssq_ref, g_ref, b_ref, y_ref, o_ref, *, m_true):
    # sum_ref/ssq_ref/g_ref/b_ref: [C_out, 1]; y_ref/o_ref: [C_out, TM]
    inv_m = 1.0 / m_true
    mean = sum_ref[...] * inv_m
    var = jnp.maximum(ssq_ref[...] * inv_m - mean * mean, 0.0)
    scale = g_ref[...] * jax.lax.rsqrt(var + EPS)   # fused gamma * rsqrt(var+eps)
    shift = b_ref[...] - mean * scale               # fused beta - mean*scale
    o_ref[...] = jax.nn.sigmoid(y_ref[...] * scale + shift)


def conv_block_forward(x, weight, bias, gamma, beta, *, stride):
    """x: [N, C_in, L] f32; weight: [C_out, C_in, K]; bias/gamma/beta: [C_out]."""
    N, C_in, L = x.shape
    C_out, _, K = weight.shape
    L_out = (L - K) // stride + 1
    M = N * L_out
    CK = C_in * K

    # --- host-side glue: transposed im2col -> [CK, M] ----------------------
    # TODO(synk): for large inputs, build the patch tile inside the kernel
    # (K strided-slice matmuls) to avoid the ~K/stride HBM inflation.
    starts = jnp.arange(L_out) * stride
    idx = starts[:, None] + jnp.arange(K)[None, :]          # [L_out, K]
    patches = x[:, :, idx]                                  # [N, C_in, L_out, K]
    patches_t = patches.transpose(1, 3, 0, 2).reshape(CK, M)  # [CK, M]

    # Tile over M (lane axis). Multiple of 128 for lane-dense stores; modest
    # per-tile VMEM footprint so double-buffering fits on all generations.
    TM = 512
    if M < TM:
        TM = _round_up(M, 128)
    M_pad = _round_up(M, TM)
    if M_pad > M:
        patches_t = jnp.pad(patches_t, ((0, 0), (0, M_pad - M)))
    num_tiles = M_pad // TM

    w_mat = weight.reshape(C_out, CK)                       # [C_out, CK]
    g_col = gamma.reshape(C_out, 1)
    b_col = beta.reshape(C_out, 1)
    del bias  # cancels exactly under train-mode BatchNorm

    # --- phase 1: conv matmul + per-channel sum / sum-of-squares -----------
    y_t, s_sum, s_ssq = pl.pallas_call(
        _conv_stats_kernel,
        out_shape=(
            jax.ShapeDtypeStruct((C_out, M_pad), jnp.float32),
            jax.ShapeDtypeStruct((C_out, 1), jnp.float32),
            jax.ShapeDtypeStruct((C_out, 1), jnp.float32),
        ),
        grid=(num_tiles,),
        in_specs=[
            pl.BlockSpec((C_out, CK), lambda i: (0, 0)),
            pl.BlockSpec((CK, TM), lambda i: (0, i)),
        ],
        out_specs=(
            pl.BlockSpec((C_out, TM), lambda i: (0, i)),
            pl.BlockSpec((C_out, 1), lambda i: (0, 0)),
            pl.BlockSpec((C_out, 1), lambda i: (0, 0)),
        ),
        compiler_params=pltpu.CompilerParams(
            dimension_semantics=("arbitrary",),          # reduction / accumulator
            vmem_limit_bytes=VMEM_LIMIT,
        ),
    )(w_mat, patches_t)

    # --- phase 2: normalize + affine + sigmoid (elementwise, parallel) -----
    out_t = pl.pallas_call(
        functools.partial(_bn_sigmoid_kernel, m_true=float(M)),
        out_shape=jax.ShapeDtypeStruct((C_out, M_pad), jnp.float32),
        grid=(num_tiles,),
        in_specs=[
            pl.BlockSpec((C_out, 1), lambda i: (0, 0)),
            pl.BlockSpec((C_out, 1), lambda i: (0, 0)),
            pl.BlockSpec((C_out, 1), lambda i: (0, 0)),
            pl.BlockSpec((C_out, 1), lambda i: (0, 0)),
            pl.BlockSpec((C_out, TM), lambda i: (0, i)),
        ],
        out_specs=pl.BlockSpec((C_out, TM), lambda i: (0, i)),
        compiler_params=pltpu.CompilerParams(
            dimension_semantics=("parallel",),           # shards across TCs on v7x
            vmem_limit_bytes=VMEM_LIMIT,
        ),
    )(s_sum, s_ssq, g_col, b_col, y_t)

    # [C_out, M_pad] -> [N, C_out, L_out]
    return out_t[:, :M].reshape(C_out, N, L_out).transpose(1, 0, 2)


def _reference(x, weight, bias, gamma, beta, *, stride):
    """Pure-JAX reference matching PyTorch ConvBlock forward (train-mode BN)."""
    y = jax.lax.conv_general_dilated(
        x, weight, window_strides=(stride,), padding="VALID",
        dimension_numbers=("NCH", "OIH", "NCH"))
    y = y + bias[None, :, None]
    mean = jnp.mean(y, axis=(0, 2), keepdims=True)
    var = jnp.mean((y - mean) ** 2, axis=(0, 2), keepdims=True)
    y_hat = (y - mean) / jnp.sqrt(var + EPS)
    return jax.nn.sigmoid(y_hat * gamma[None, :, None] + beta[None, :, None])


if __name__ == "__main__":
    # Module hyperparameters (ConvBlock(input_size, output_size, kernel_size, stride))
    input_size, output_size, kernel_size, stride = 4, 8, 3, 2
    N, L = 2, 16

    key = jax.random.PRNGKey(0)
    kx, kw, kb = jax.random.split(key, 3)

    x = jax.random.normal(kx, (N, input_size, L), dtype=jnp.float32)

    # Deterministic synthetic parameters (shapes per nn.Conv1d / nn.BatchNorm1d)
    weight = 0.1 * jax.random.normal(kw, (output_size, input_size, kernel_size),
                                     dtype=jnp.float32)
    bias = 0.1 * jax.random.normal(kb, (output_size,), dtype=jnp.float32)
    gamma = jnp.ones((output_size,), dtype=jnp.float32)   # BatchNorm1d weight init
    beta = jnp.zeros((output_size,), dtype=jnp.float32)   # BatchNorm1d bias init

    out = conv_block_forward(x, weight, bias, gamma, beta, stride=stride)
    out = jax.block_until_ready(out)

    ref = _reference(x, weight, bias, gamma, beta, stride=stride)
    assert out.shape == ref.shape == (N, output_size, (L - kernel_size) // stride + 1)
    assert jnp.allclose(out, ref, atol=1e-5, rtol=1e-5)

    print("KERNEL_OK")
</pallas_src>

<mosaic_0001>
module attributes {stable_mosaic.version = 11 : i64} {
  func.func @_conv_stats_kernel(%arg0: i32, %arg1: memref<8x12xf32, #tpu.memory_space<vmem>>, %arg2: memref<12x128xf32, #tpu.memory_space<vmem>>, %arg3: memref<8x128xf32, #tpu.memory_space<vmem>>, %arg4: memref<8x1xf32, #tpu.memory_space<vmem>>, %arg5: memref<8x1xf32, #tpu.memory_space<vmem>>) attributes {dimension_semantics = [#tpu.dimension_semantics<arbitrary>], iteration_bounds = array<i64: 1>, scalar_prefetch = 0 : i64, scratch_operands = 0 : i64, tpu.core_type = #tpu.core_type<tc>, window_params = [{pipeline_mode = #tpu.pipeline_mode<synchronous>, transform_indices = @transform_0, window_bounds = array<i64: 8, 12>}, {transform_indices = @transform_1, window_bounds = array<i64: 12, 128>}, {transform_indices = @transform_2, window_bounds = array<i64: 8, 128>}, {pipeline_mode = #tpu.pipeline_mode<synchronous>, transform_indices = @transform_3, window_bounds = array<i64: 8, 1>}, {pipeline_mode = #tpu.pipeline_mode<synchronous>, transform_indices = @transform_4, window_bounds = array<i64: 8, 1>}]} {
    %c0_i32 = arith.constant 0 : i32
    %0 = arith.cmpi eq, %arg0, %c0_i32 : i32
    %1 = arith.extui %0 : i1 to i32
    %c0_i32_0 = arith.constant 0 : i32
    %2 = arith.cmpi ne, %1, %c0_i32_0 : i32
    scf.if %2 {
      %cst_16 = arith.constant 0.000000e+00 : f32
      %18 = vector.broadcast %cst_16 : f32 to vector<8x1xf32>
      %c0_17 = arith.constant 0 : index
      %c0_18 = arith.constant 0 : index
      %19 = vector.load %arg4[%c0_17, %c0_18] : memref<8x1xf32, #tpu.memory_space<vmem>>, vector<8x1xf32>
      tpu.vector_store %arg4[%c0_17, %c0_18], %18 {strides = array<i32>} : memref<8x1xf32, #tpu.memory_space<vmem>>, vector<8x1xf32>,
      %cst_19 = arith.constant 0.000000e+00 : f32
      %20 = vector.broadcast %cst_19 : f32 to vector<8x1xf32>
      %c0_20 = arith.constant 0 : index
      %c0_21 = arith.constant 0 : index
      %21 = vector.load %arg5[%c0_20, %c0_21] : memref<8x1xf32, #tpu.memory_space<vmem>>, vector<8x1xf32>
      tpu.vector_store %arg5[%c0_20, %c0_21], %20 {strides = array<i32>} : memref<8x1xf32, #tpu.memory_space<vmem>>, vector<8x1xf32>,
    } else {
    }
    %c0 = arith.constant 0 : index
    %c0_1 = arith.constant 0 : index
    %3 = vector.load %arg1[%c0, %c0_1] : memref<8x12xf32, #tpu.memory_space<vmem>>, vector<8x12xf32>
    %c0_2 = arith.constant 0 : index
    %c0_3 = arith.constant 0 : index
    %4 = vector.load %arg2[%c0_2, %c0_3] : memref<12x128xf32, #tpu.memory_space<vmem>>, vector<12x128xf32>
    %cst = arith.constant dense<0.000000e+00> : vector<8x128xf32>
    %5 = tpu.matmul %3, %4, %cst {dimension_numbers = #tpu.dot_dimension_numbers<[1], [0], [0], [1], [0, 0, 1, 1], [], []>} : vector<8x12xf32>, vector<12x128xf32>, vector<8x128xf32> -> vector<8x128xf32>
    %c0_4 = arith.constant 0 : index
    %c0_5 = arith.constant 0 : index
    %6 = vector.load %arg3[%c0_4, %c0_5] : memref<8x128xf32, #tpu.memory_space<vmem>>, vector<8x128xf32>
    tpu.vector_store %arg3[%c0_4, %c0_5], %5 {strides = array<i32>} : memref<8x128xf32, #tpu.memory_space<vmem>>, vector<8x128xf32>,
    %c0_6 = arith.constant 0 : index
    %c0_7 = arith.constant 0 : index
    %7 = vector.load %arg4[%c0_6, %c0_7] : memref<8x1xf32, #tpu.memory_space<vmem>>, vector<8x1xf32>
    %cst_8 = arith.constant dense<0.000000e+00> : vector<8xf32>
    %8 = vector.multi_reduction <add>, %5, %cst_8 [1] : vector<8x128xf32> to vector<8xf32>
    %9 = vector.shape_cast %8 : vector<8xf32> to vector<8x1xf32>
    %10 = arith.addf %7, %9 : vector<8x1xf32>
    %c0_9 = arith.constant 0 : index
    %c0_10 = arith.constant 0 : index
    %11 = vector.load %arg4[%c0_9, %c0_10] : memref<8x1xf32, #tpu.memory_space<vmem>>, vector<8x1xf32>
    tpu.vector_store %arg4[%c0_9, %c0_10], %10 {strides = array<i32>} : memref<8x1xf32, #tpu.memory_space<vmem>>, vector<8x1xf32>,
    %c0_11 = arith.constant 0 : index
    %c0_12 = arith.constant 0 : index
    %12 = vector.load %arg5[%c0_11, %c0_12] : memref<8x1xf32, #tpu.memory_space<vmem>>, vector<8x1xf32>
    %13 = arith.mulf %5, %5 : vector<8x128xf32>
    %cst_13 = arith.constant dense<0.000000e+00> : vector<8xf32>
    %14 = vector.multi_reduction <add>, %13, %cst_13 [1] : vector<8x128xf32> to vector<8xf32>
    %15 = vector.shape_cast %14 : vector<8xf32> to vector<8x1xf32>
    %16 = arith.addf %12, %15 : vector<8x1xf32>
    %c0_14 = arith.constant 0 : index
    %c0_15 = arith.constant 0 : index
    %17 = vector.load %arg5[%c0_14, %c0_15] : memref<8x1xf32, #tpu.memory_space<vmem>>, vector<8x1xf32>
    tpu.vector_store %arg5[%c0_14, %c0_15], %16 {strides = array<i32>} : memref<8x1xf32, #tpu.memory_space<vmem>>, vector<8x1xf32>,
    return
  }
  func.func @transform_0(%arg0: i32) -> (i32, i32) {
    %c0_i32 = arith.constant 0 : i32
    %c0_i32_0 = arith.constant 0 : i32
    %c0_i32_1 = arith.constant 0 : i32
    return %c0_i32, %c0_i32_0 : i32, i32
  }
  func.func @transform_1(%arg0: i32) -> (i32, i32) {
    %c0_i32 = arith.constant 0 : i32
    %c0_i32_0 = arith.constant 0 : i32
    return %c0_i32, %arg0 : i32, i32
  }
  func.func @transform_2(%arg0: i32) -> (i32, i32) {
    %c0_i32 = arith.constant 0 : i32
    %c0_i32_0 = arith.constant 0 : i32
    return %c0_i32, %arg0 : i32, i32
  }
  func.func @transform_3(%arg0: i32) -> (i32, i32) {
    %c0_i32 = arith.constant 0 : i32
    %c0_i32_0 = arith.constant 0 : i32
    %c0_i32_1 = arith.constant 0 : i32
    return %c0_i32, %c0_i32_0 : i32, i32
  }
  func.func @transform_4(%arg0: i32) -> (i32, i32) {
    %c0_i32 = arith.constant 0 : i32
    %c0_i32_0 = arith.constant 0 : i32
    %c0_i32_1 = arith.constant 0 : i32
    return %c0_i32, %c0_i32_0 : i32, i32
  }
}

</mosaic_0001>

<llo_original>
// kernel: tpu_custom_call.1
$region0: #{tpu_custom_call.1}
  #allocation0 [shape = 'u32[]', space=smem, size = 0x4, offset = 0x4, fixed_abs, tag = 'smem constant byte address 0x4 - core index']
  #allocation1 [shape = 'u32[144,128]{1,0:T(1,128)}', space=vmem, size = 0x12000, scoped, tag = 'internal scratch']
  %s0 = inlined_call_operand.hbm [shape: f32[8,12], index: 0, kind: input, shape index: {}]
  %s1 = inlined_call_operand.hbm [shape: f32[12,128], index: 1, kind: input, shape index: {}]
  %s2 = inlined_call_operand.hbm [shape: f32[8,128], index: 2, kind: output, shape index: {0}]
  %s3 = inlined_call_operand.vmem [shape: f32[8,1], index: 3, kind: output, shape index: {1}]
  %s4 = inlined_call_operand.vmem [shape: f32[8,1], index: 4, kind: output, shape index: {2}]
  %5 = xla_tuple %s2, %s3, %s4
  %s6 = sld [smem:[#allocation0]]
  $region46: #{tpu_custom_call.1} parent=0
    _
  %s8 = ssub.s32 1, %s6
  %s9 = scalar_select 0, %s8, %s6
  $region1: #{tpu_custom_call.1} parent=0
    #allocation2 [shape = 'u8[4096]{0}', space=vmem, size = 0x1000, scoped, tag = 'input window, operand 0, single buffered']
    #allocation3 [shape = 's32[1]{0}', space=sflag, size = 0x4, scoped, tag = 'scoped memory for tpu_custom_call.1']
    #allocation4 [shape = 's32[1]{0}', space=sflag, size = 0x4, scoped, tag = 'scoped memory for tpu_custom_call.1']
    #allocation5 [shape = 'u8[8192]{0}', space=vmem, size = 0x2000, scoped, tag = 'input window, operand 1, single buffered']
    #allocation6 [shape = 's32[1]{0}', space=sflag, size = 0x4, scoped, tag = 'scoped memory for tpu_custom_call.1']
    #allocation7 [shape = 'u8[4096]{0}', space=vmem, size = 0x1000, scoped, tag = 'output window, operand 0, single buffered']
    %10 = vsyncpa [#allocation3], 0
    %11 = vsyncpa [#allocation6], 0
    %12 = vsyncpa [#allocation4], 0
    // Predicated region
    $region2: #{tpu_custom_call.1} parent=1 // pred_check
      _
    $region3: #{tpu_custom_call.1} parent=1 // pred_check_branch
      %14 = sbr.rel (0) target = $region5
    $region4: #{tpu_custom_call.1} parent=1 // pred_region
      %s16 = ssub.s32 128, 128
      %17 = vsyncadd [#allocation3], %s16
      %s19 = sshll.u32 [#allocation2], 4
      %s20 = int_to_ptr.vmem [resolvable:$true] %s19
      %22 = dma.hbm_to_vmem [thread:$0]  %s0, 128, %s20, [#allocation3]
    $region5: #{tpu_custom_call.1} parent=1 // pred_fallthru
      _
    // Predicated region
    $region6: #{tpu_custom_call.1} parent=1 // pred_check
      _
    $region7: #{tpu_custom_call.1} parent=1 // pred_check_branch
      %24 = sbr.rel (0) target = $region9
    $region8: #{tpu_custom_call.1} parent=1 // pred_region
      %s26 = ssub.s32 256, 256
      %27 = vsyncadd [#allocation6], %s26
      %s28 = sshll.u32 [#allocation5], 4
      %s29 = int_to_ptr.vmem [resolvable:$true] %s28
      %34 = dma.hbm_to_vmem [thread:$0]  %s1, 256, %s29, [#allocation6], 128, 128, 8
    $region9: #{tpu_custom_call.1} parent=1 // pred_fallthru
      _
    // Predicated region
    $region10: #{tpu_custom_call.1} parent=1 // pred_check
      _
    $region11: #{tpu_custom_call.1} parent=1 // pred_check_branch
      %36 = sbr.rel (0) target = $region13
    $region12: #{tpu_custom_call.1} parent=1 // pred_region
      %37 = dma.done [#allocation3], 128
    $region13: #{tpu_custom_call.1} parent=1 // pred_fallthru
      _
    // Predicated region
    $region14: #{tpu_custom_call.1} parent=1 // pred_check
      _
    $region15: #{tpu_custom_call.1} parent=1 // pred_check_branch
      %39 = sbr.rel (0) target = $region17
    $region16: #{tpu_custom_call.1} parent=1 // pred_region
      %40 = dma.done [#allocation6], 256
    $region17: #{tpu_custom_call.1} parent=1 // pred_fallthru
      _
    %p41 = scmp.eq.s32.totalorder 0, 0
    // Predicated region
    $region18: #{tpu_custom_call.1} parent=1 // pred_check
      %p42 = pneg %p41
    $region19: #{tpu_custom_call.1} parent=1 // pred_check_branch
      %44 = sbr.rel (%p42) target = $region21
    $region20: #{tpu_custom_call.1} parent=1 // pred_region
      %vm45 = vcmask 7168
      %46 = vst.msk [vmem:[%s3] sm:$0xff] %vm45, 0.0
      %47 = vst.msk [vmem:[%s4] sm:$0xff] %vm45, 0.0
    $region21: #{tpu_custom_call.1} parent=1 // pred_fallthru
      _
    %v48 = vld [vmem:[#allocation2] sm:$0xff]
    %v49 = vld [vmem:[#allocation5] sm:$0xff]
    %v50 = vld [vmem:[#allocation5 + $0x8] sm:$0xf]
    %vm51 = vcmask 97280
    %v53 = vsel %vm51, %v48, 0
    %vm55 = vcmask 1043456
    %v57 = vsel %vm55, %v50, 0
    %59 = vmatprep.subr.mxu0 0.0
    %60 = vmatpush1.msra.mxu0 %v49
    %61 = vmatprep.subr.mxu0 0.0
    %62 = vmatpush1.msra.mxu0 %v57
    %63 = vmatprep.subr.mxu0 0.0
    %64 = vmatpush1.msra.mxu0 0.0
    %65 = vmatprep.subr.mxu0 0.0
    %66 = vmatpush1.msra.mxu0 0.0
    %67 = vmatprep.subr.mxu0 0.0
    %68 = vmatpush1.msra.mxu0 0.0
    %69 = vmatprep.subr.mxu0 0.0
    %70 = vmatpush1.msra.mxu0 0.0
    %71 = vmatprep.subr.mxu0 0.0
    %72 = vmatpush1.msra.mxu0 0.0
    %73 = vmatprep.subr.mxu0 0.0
    %74 = vmatpush1.msra.mxu0 0.0
    %75 = vmatprep.subr.mxu0 0.0
    %76 = vmatpush1.msra.mxu0 0.0
    %77 = vmatprep.subr.mxu0 0.0
    %78 = vmatpush1.msra.mxu0 0.0
    %79 = vmatprep.subr.mxu0 0.0
    %80 = vmatpush1.msra.mxu0 0.0
    %81 = vmatprep.subr.mxu0 0.0
    %82 = vmatpush1.msra.mxu0 0.0
    %83 = vmatprep.subr.mxu0 0.0
    %84 = vmatpush1.msra.mxu0 0.0
    %85 = vmatprep.subr.mxu0 0.0
    %86 = vmatpush1.msra.mxu0 0.0
    %87 = vmatprep.subr.mxu0 0.0
    %88 = vmatpush1.msra.mxu0 0.0
    %89 = vmatprep.subr.mxu0 0.0
    %90 = vmatpush1.msra.mxu0 0.0
    %91 = vmatprep.subr.mxu0 0.0
    %92 = vmatpush1.msra.mxu0 0.0
    %93 = vmatprep.subr.mxu0 0.0
    %94 = vmatpush1.msra.mxu0 0.0
    %95 = vmatprep.subr.mxu0 0.0
    %96 = vmatpush1.msra.mxu0 0.0
    %97 = vmatprep.subr.mxu0 0.0
    %98 = vmatpush1.msra.mxu0 0.0
    %99 = vmatprep.subr.mxu0 0.0
    %100 = vmatpush1.msra.mxu0 0.0
    %101 = vmatprep.subr.mxu0 0.0
    %102 = vmatpush1.msra.mxu0 0.0
    %103 = vmatprep.subr.mxu0 0.0
    %104 = vmatpush1.msra.mxu0 0.0
    %105 = vmatprep.subr.mxu0 0.0
    %106 = vmatpush1.msra.mxu0 0.0
    %107 = vmatprep.subr.mxu0 0.0
    %108 = vmatpush1.msra.mxu0 0.0
    %109 = vmatprep.subr.mxu0 0.0
    %110 = vmatpush1.msra.mxu0 0.0
    %111 = vmatprep.subr.mxu0 0.0
    %112 = vmatpush1.msra.mxu0 0.0
    %113 = vmatprep.subr.mxu0 0.0
    %114 = vmatpush1.msra.mxu0 0.0
    %115 = vmatprep.subr.mxu0 0.0
    %116 = vmatpush1.msra.mxu0 0.0
    %117 = vmatprep.subr.mxu0 0.0
    %118 = vmatpush1.msra.mxu0 0.0
    %119 = vmatprep.subr.mxu0 0.0
    %120 = vmatpush1.msra.mxu0 0.0
    %121 = vmatprep.subr.mxu0 0.0
    %122 = vmatpush1.msra.mxu0 0.0
    %123 = vmatprep.mubr.f32.mxu0 0.0
    %124 = vmatmul.mubr.f32.gmra.mrb[0].mxu0 %v53
    %v125 = vpop.f32.mrb[0].mxu0
    %v126 = vadd.f32 0.0, %v125
    %v127 = vpop.f32.mrb[0].mxu0
    %128 = vdwg.mxu0
    %129 = vst [vmem:[#allocation7] sm:$0xff] %v126
    %v130 = vld [vmem:[%s3] sm:$0xff]
    %131 = vadd.xlane.f32.xlu0 %v126
    %v132 = vpop.xlane.xlu0 %131
    %v133 = vadd.f32 %v130, %v132
    %vm134 = vcmask 7168
    %135 = vst.msk [vmem:[%s3] sm:$0xff] %vm134, %v133
    %v136 = vld [vmem:[%s4] sm:$0xff]
    %v137 = vmul.f32 %v126, %v126
    %138 = vadd.xlane.f32.xlu0 %v137
    %v139 = vpop.xlane.xlu0 %138
    %v140 = vadd.f32 %v136, %v139
    %141 = vst.msk [vmem:[%s4] sm:$0xff] %vm134, %v140
    // Predicated region
    $region22: #{tpu_custom_call.1} parent=1 // pred_check
      _
    $region23: #{tpu_custom_call.1} parent=1 // pred_check_branch
      %143 = sbr.rel (0) target = $region25
    $region24: #{tpu_custom_call.1} parent=1 // pred_region
      %s145 = ssub.s32 128, 128
      %146 = vsyncadd [#allocation4], %s145
      %s148 = sshll.u32 [#allocation7], 4
      %s149 = int_to_ptr.vmem [resolvable:$true] %s148
      %151 = dma.vmem_to_hbm [thread:$0]  %s149, 128, %s2, [#allocation4]
    $region25: #{tpu_custom_call.1} parent=1 // pred_fallthru
      _
    // Predicated region
    $region26: #{tpu_custom_call.1} parent=1 // pred_check
      _
    $region27: #{tpu_custom_call.1} parent=1 // pred_check_branch
      %153 = sbr.rel (0) target = $region29
    $region28: #{tpu_custom_call.1} parent=1 // pred_region
      _
    $region29: #{tpu_custom_call.1} parent=1 // pred_fallthru
      _
    // Predicated region
    $region30: #{tpu_custom_call.1} parent=1 // pred_check
      _
    $region31: #{tpu_custom_call.1} parent=1 // pred_check_branch
      %155 = sbr.rel (0) target = $region33
    $region32: #{tpu_custom_call.1} parent=1 // pred_region
      _
    $region33: #{tpu_custom_call.1} parent=1 // pred_fallthru
      _
    // Predicated region
    $region34: #{tpu_custom_call.1} parent=1 // pred_check
      _
    $region35: #{tpu_custom_call.1} parent=1 // pred_check_branch
      %157 = sbr.rel (0) target = $region37
    $region36: #{tpu_custom_call.1} parent=1 // pred_region
      %158 = dma.done [#allocation4], 128
    $region37: #{tpu_custom_call.1} parent=1 // pred_fallthru
      _
    // Predicated region
    $region38: #{tpu_custom_call.1} parent=1 // pred_check
      _
    $region39: #{tpu_custom_call.1} parent=1 // pred_check_branch
      %160 = sbr.rel (0) target = $region41
    $region40: #{tpu_custom_call.1} parent=1 // pred_region
      _
    $region41: #{tpu_custom_call.1} parent=1 // pred_fallthru
      _
    // Predicated region
    $region42: #{tpu_custom_call.1} parent=1 // pred_check
      _
    $region43: #{tpu_custom_call.1} parent=1 // pred_check_branch
      %162 = sbr.rel (0) target = $region45
    $region44: #{tpu_custom_call.1} parent=1 // pred_region
      _
    $region45: #{tpu_custom_call.1} parent=1 // pred_fallthru
      _
    %163 = vsyncpa [#allocation3], 1
    %164 = vsyncpa [#allocation6], 1
    %165 = vsyncpa [#allocation4], 1

</llo_original>
